<compile_context>
chip_gen: v7x
topology: tpu7x:2x2x1
jax: 0.10.0
libtpu: 0.0.40
codegen_flags: <defaults>
</compile_context>

<pallas_src>
import jax
import jax.numpy as jnp
from jax import lax
from jax.experimental import pallas as pl
from jax.experimental.pallas import tpu as pltpu


def _labelmix_kernel(bits_ref, label_ref, fake_ref, real_ref,
                     mixed_ref, tmap_ref):
    """One (batch, spatial-tile) block per grid step.

    bits_ref  : SMEM (C,) int32 -- precomputed random 0/1 bit per class
    label_ref : VMEM (1, C,  TS, LANE)   label scores (bf16/f32)
    fake_ref  : VMEM (1, CI, TS, LANE)
    real_ref  : VMEM (1, CI, TS, LANE)
    mixed_ref : VMEM (1, CI, TS, LANE)   output mixed image
    tmap_ref  : VMEM (1, 1,  TS, LANE)   output binary target map
    """
    C = label_ref.shape[1]

    # Fused argmax-over-classes + per-class random-bit remap:
    # track (running max, chosen bit) -- first-max tie-break like torch/jnp.
    best0 = label_ref[0, 0].astype(jnp.float32)                 # (TS, LANE)
    tbit0 = jnp.full(best0.shape, bits_ref[0].astype(jnp.float32),
                     dtype=jnp.float32)

    def body(c, carry):
        best, tbit = carry
        v = label_ref[0, c].astype(jnp.float32)                 # per-class plane
        b = bits_ref[c].astype(jnp.float32)                     # scalar 0/1
        take = v > best
        best = jnp.where(take, v, best)
        tbit = jnp.where(take, b, tbit)
        return best, tbit

    _, tbit = lax.fori_loop(1, C, body, (best0, tbit0), unroll=(C <= 8))

    # mixed = mask * real + (1 - mask) * fake  (mask is binary -> pure select)
    use_real = tbit > 0.5                                        # (TS, LANE) bool
    mixed_ref[0] = jnp.where(use_real[None, :, :],
                             real_ref[0], fake_ref[0]).astype(mixed_ref.dtype)
    tmap_ref[0, 0] = tbit.astype(tmap_ref.dtype)


def _choose_spatial_tile(S, max_rows):
    """Largest tile of the sublane-row axis that divides S and is either the
    full axis or a multiple of 8 (the (8,128) BlockSpec constraint)."""
    if S <= max_rows:
        return S
    for ts in range(min(max_rows, S), 7, -1):
        if S % ts == 0 and ts % 8 == 0:
            return ts
    return S  # fallback: whole axis (always a legal block)


def generate_labelmix_pallas(label, fake_image, real_image, key, *,
                             cast_label_bf16=True,
                             tmap_dtype=jnp.float32,
                             spatial_tile_rows=128):
    """Pallas equivalent of generate_labelmix(label, fake_image, real_image).

    Per-class random 0/1 bits are drawn deterministically from `key` (one bit
    per class index).  Per-pixel distribution matches the reference; exact RNG
    sequence differs from torch (which draws only for classes present).
    """
    N, C, H, W = label.shape
    _, CI, _, _ = fake_image.shape
    HW = H * W

    # Lane-dense spatial layout: (N, C, H, W) -> (N, C, S, LANE), free reshape.
    if HW % 128 == 0:
        LANE = 128
        S = HW // 128
    else:
        LANE = HW
        S = 1
    TS = _choose_spatial_tile(S, spatial_tile_rows)

    # bf16 label halves the dominant HBM stream; exact for one-hot labels.
    if cast_label_bf16 and label.dtype == jnp.float32:
        label = label.astype(jnp.bfloat16)
    # TODO(synk): callers can additionally pass bf16 fake/real to halve image
    #             traffic; the select-based blend is exact in any dtype.

    lab4 = label.reshape(N, C, S, LANE)
    fake4 = fake_image.reshape(N, CI, S, LANE)
    real4 = real_image.reshape(N, CI, S, LANE)

    bits = jax.random.randint(key, (C,), 0, 2, dtype=jnp.int32)

    grid = (N, S // TS)
    grid_spec = pltpu.PrefetchScalarGridSpec(
        num_scalar_prefetch=1,                 # bits -> SMEM
        grid=grid,
        in_specs=[
            pl.BlockSpec((1, C, TS, LANE), lambda n, s, bits: (n, 0, s, 0)),
            pl.BlockSpec((1, CI, TS, LANE), lambda n, s, bits: (n, 0, s, 0)),
            pl.BlockSpec((1, CI, TS, LANE), lambda n, s, bits: (n, 0, s, 0)),
        ],
        out_specs=(
            pl.BlockSpec((1, CI, TS, LANE), lambda n, s, bits: (n, 0, s, 0)),
            pl.BlockSpec((1, 1, TS, LANE), lambda n, s, bits: (n, 0, s, 0)),
        ),
    )

    mixed4, tmap4 = pl.pallas_call(
        _labelmix_kernel,
        grid_spec=grid_spec,
        out_shape=(
            jax.ShapeDtypeStruct((N, CI, S, LANE), fake_image.dtype),
            jax.ShapeDtypeStruct((N, 1, S, LANE), tmap_dtype),
        ),
        compiler_params=pltpu.CompilerParams(
            dimension_semantics=("parallel", "parallel"),
            vmem_limit_bytes=32 * 1024 * 1024,
        ),
    )(bits, lab4, fake4, real4)

    mixed = mixed4.reshape(N, CI, H, W)
    tmap = tmap4.reshape(N, 1, H, W)
    return mixed, tmap, bits


class OASISModelPallas:
    """Skeleton mirroring OASIS_model.forward().  Only the labelmix mixing
    (the tensor hot path available from the provided source) runs in Pallas.
    """
    # TODO(synk): netG (OASIS_Generator) and netD (OASIS_Discriminator) source
    #             not provided -- 'losses_G'/'losses_D' adversarial terms and
    #             'generate' mode cannot be reproduced.
    # TODO(synk): DiffAugment / losses_computer not provided.

    def labelmix(self, input_label, fake, real, key):
        # forward() calls generate_labelmix(input[:, :-1, :, :], fake, image)
        label = input_label[:, :-1, :, :]
        return generate_labelmix_pallas(label, fake, real, key)


if __name__ == "__main__":
    key = jax.random.PRNGKey(0)
    k_lab, k_fake, k_real, k_bits = jax.random.split(key, 4)

    N, SEM_NC, H, W = 2, 5, 16, 16        # semantic_nc=5 -> label uses first 4
    C = SEM_NC - 1

    # deterministic "input" label map (one-hot over SEM_NC channels) and images
    cls = jax.random.randint(k_lab, (N, H, W), 0, C)
    input_label = jax.nn.one_hot(cls, SEM_NC, axis=1, dtype=jnp.float32)
    fake = jax.random.normal(k_fake, (N, 3, H, W), jnp.float32)
    real = jax.random.normal(k_real, (N, 3, H, W), jnp.float32)

    model = OASISModelPallas()
    mixed, tmap, bits = model.labelmix(input_label, fake, real, k_bits)
    jax.block_until_ready((mixed, tmap))

    # pure-JAX reference check of the same semantics
    label = input_label[:, :-1, :, :]
    tm_idx = jnp.argmax(label, axis=1, keepdims=True)          # (N,1,H,W)
    tm_ref = bits[tm_idx].astype(jnp.float32)
    mixed_ref = tm_ref * real + (1.0 - tm_ref) * fake

    assert jnp.allclose(tmap, tm_ref), "target_map mismatch"
    assert jnp.allclose(mixed, mixed_ref, atol=1e-6), "mixed image mismatch"
    print("KERNEL_OK")
</pallas_src>

<mosaic_0001>
module attributes {stable_mosaic.version = 11 : i64} {
  func.func @_labelmix_kernel(%arg0: i32, %arg1: i32, %arg2: memref<4xi32, #tpu.memory_space<smem>>, %arg3: memref<1x4x2x128xbf16, #tpu.memory_space<vmem>>, %arg4: memref<1x3x2x128xf32, #tpu.memory_space<vmem>>, %arg5: memref<1x3x2x128xf32, #tpu.memory_space<vmem>>, %arg6: memref<1x3x2x128xf32, #tpu.memory_space<vmem>>, %arg7: memref<1x1x2x128xf32, #tpu.memory_space<vmem>>) attributes {dimension_semantics = [#tpu.dimension_semantics<parallel>, #tpu.dimension_semantics<parallel>], iteration_bounds = array<i64: 2, 1>, scalar_prefetch = 1 : i64, scratch_operands = 0 : i64, tpu.core_type = #tpu.core_type<tc>, window_params = [{transform_indices = @transform_0, window_bounds = array<i64: 1, 4, 2, 128>}, {transform_indices = @transform_1, window_bounds = array<i64: 1, 3, 2, 128>}, {transform_indices = @transform_2, window_bounds = array<i64: 1, 3, 2, 128>}, {transform_indices = @transform_3, window_bounds = array<i64: 1, 3, 2, 128>}, {transform_indices = @transform_4, window_bounds = array<i64: 1, 1, 2, 128>}]} {
    %c0 = arith.constant 0 : index
    %c0_0 = arith.constant 0 : index
    %c0_1 = arith.constant 0 : index
    %c0_2 = arith.constant 0 : index
    %0 = vector.load %arg3[%c0, %c0_0, %c0_1, %c0_2] : memref<1x4x2x128xbf16, #tpu.memory_space<vmem>>, vector<1x1x2x128xbf16>
    %1 = vector.shape_cast %0 : vector<1x1x2x128xbf16> to vector<2x128xbf16>
    %2 = arith.extf %1 : vector<2x128xbf16> to vector<2x128xf32>
    %c0_3 = arith.constant 0 : index
    %3 = memref.load %arg2[%c0_3] : memref<4xi32, #tpu.memory_space<smem>>
    %4 = arith.sitofp %3 : i32 to f32
    %5 = vector.broadcast %4 : f32 to vector<2x128xf32>
    %c1_i32 = arith.constant 1 : i32
    %c0_4 = arith.constant 0 : index
    %6 = arith.index_cast %c1_i32 : i32 to index
    %c0_5 = arith.constant 0 : index
    %c0_6 = arith.constant 0 : index
    %7 = vector.load %arg3[%c0_4, %6, %c0_5, %c0_6] : memref<1x4x2x128xbf16, #tpu.memory_space<vmem>>, vector<1x1x2x128xbf16>
    %8 = vector.shape_cast %7 : vector<1x1x2x128xbf16> to vector<2x128xbf16>
    %9 = arith.extf %8 : vector<2x128xbf16> to vector<2x128xf32>
    %10 = arith.index_cast %c1_i32 : i32 to index
    %11 = memref.load %arg2[%10] : memref<4xi32, #tpu.memory_space<smem>>
    %12 = arith.sitofp %11 : i32 to f32
    %13 = arith.cmpf ogt, %9, %2 : vector<2x128xf32>
    %14 = arith.select %13, %9, %2 : vector<2x128xi1>, vector<2x128xf32>
    %15 = vector.broadcast %12 : f32 to vector<2x128xf32>
    %16 = arith.select %13, %15, %5 : vector<2x128xi1>, vector<2x128xf32>
    %c2_i32 = arith.constant 2 : i32
    %c0_7 = arith.constant 0 : index
    %17 = arith.index_cast %c2_i32 : i32 to index
    %c0_8 = arith.constant 0 : index
    %c0_9 = arith.constant 0 : index
    %18 = vector.load %arg3[%c0_7, %17, %c0_8, %c0_9] : memref<1x4x2x128xbf16, #tpu.memory_space<vmem>>, vector<1x1x2x128xbf16>
    %19 = vector.shape_cast %18 : vector<1x1x2x128xbf16> to vector<2x128xbf16>
    %20 = arith.extf %19 : vector<2x128xbf16> to vector<2x128xf32>
    %21 = arith.index_cast %c2_i32 : i32 to index
    %22 = memref.load %arg2[%21] : memref<4xi32, #tpu.memory_space<smem>>
    %23 = arith.sitofp %22 : i32 to f32
    %24 = arith.cmpf ogt, %20, %14 : vector<2x128xf32>
    %25 = arith.select %24, %20, %14 : vector<2x128xi1>, vector<2x128xf32>
    %26 = vector.broadcast %23 : f32 to vector<2x128xf32>
    %27 = arith.select %24, %26, %16 : vector<2x128xi1>, vector<2x128xf32>
    %c3_i32 = arith.constant 3 : i32
    %c0_10 = arith.constant 0 : index
    %28 = arith.index_cast %c3_i32 : i32 to index
    %c0_11 = arith.constant 0 : index
    %c0_12 = arith.constant 0 : index
    %29 = vector.load %arg3[%c0_10, %28, %c0_11, %c0_12] : memref<1x4x2x128xbf16, #tpu.memory_space<vmem>>, vector<1x1x2x128xbf16>
    %30 = vector.shape_cast %29 : vector<1x1x2x128xbf16> to vector<2x128xbf16>
    %31 = arith.extf %30 : vector<2x128xbf16> to vector<2x128xf32>
    %32 = arith.index_cast %c3_i32 : i32 to index
    %33 = memref.load %arg2[%32] : memref<4xi32, #tpu.memory_space<smem>>
    %34 = arith.sitofp %33 : i32 to f32
    %35 = arith.cmpf ogt, %31, %25 : vector<2x128xf32>
    %36 = arith.select %35, %31, %25 : vector<2x128xi1>, vector<2x128xf32>
    %37 = vector.broadcast %34 : f32 to vector<2x128xf32>
    %38 = arith.select %35, %37, %27 : vector<2x128xi1>, vector<2x128xf32>
    %c3_i32_13 = arith.constant 3 : i32
    %cst = arith.constant 5.000000e-01 : f32
    %39 = vector.broadcast %cst : f32 to vector<2x128xf32>
    %40 = arith.cmpf ogt, %38, %39 : vector<2x128xf32>
    %41 = vector.shape_cast %40 : vector<2x128xi1> to vector<1x2x128xi1>
    %c0_14 = arith.constant 0 : index
    %c0_15 = arith.constant 0 : index
    %c0_16 = arith.constant 0 : index
    %c0_17 = arith.constant 0 : index
    %42 = vector.load %arg5[%c0_14, %c0_15, %c0_16, %c0_17] : memref<1x3x2x128xf32, #tpu.memory_space<vmem>>, vector<1x3x2x128xf32>
    %43 = vector.shape_cast %42 : vector<1x3x2x128xf32> to vector<3x2x128xf32>
    %c0_18 = arith.constant 0 : index
    %c0_19 = arith.constant 0 : index
    %c0_20 = arith.constant 0 : index
    %c0_21 = arith.constant 0 : index
    %44 = vector.load %arg4[%c0_18, %c0_19, %c0_20, %c0_21] : memref<1x3x2x128xf32, #tpu.memory_space<vmem>>, vector<1x3x2x128xf32>
    %45 = vector.shape_cast %44 : vector<1x3x2x128xf32> to vector<3x2x128xf32>
    %46 = vector.shape_cast %41 : vector<1x2x128xi1> to vector<1x2x128xi1>
    %47 = vector.broadcast %46 : vector<1x2x128xi1> to vector<3x2x128xi1>
    %48 = arith.select %47, %43, %45 : vector<3x2x128xi1>, vector<3x2x128xf32>
    %c0_22 = arith.constant 0 : index
    %c0_23 = arith.constant 0 : index
    %c0_24 = arith.constant 0 : index
    %c0_25 = arith.constant 0 : index
    %49 = vector.load %arg6[%c0_22, %c0_23, %c0_24, %c0_25] : memref<1x3x2x128xf32, #tpu.memory_space<vmem>>, vector<1x3x2x128xf32>
    %50 = vector.shape_cast %49 : vector<1x3x2x128xf32> to vector<3x2x128xf32>
    %51 = vector.shape_cast %48 : vector<3x2x128xf32> to vector<1x3x2x128xf32>
    tpu.vector_store %arg6[%c0_22, %c0_23, %c0_24, %c0_25], %51 {strides = array<i32>} : memref<1x3x2x128xf32, #tpu.memory_space<vmem>>, vector<1x3x2x128xf32>,
    %c0_26 = arith.constant 0 : index
    %c0_27 = arith.constant 0 : index
    %c0_28 = arith.constant 0 : index
    %c0_29 = arith.constant 0 : index
    %52 = vector.load %arg7[%c0_26, %c0_27, %c0_28, %c0_29] : memref<1x1x2x128xf32, #tpu.memory_space<vmem>>, vector<1x1x2x128xf32>
    %53 = vector.shape_cast %52 : vector<1x1x2x128xf32> to vector<2x128xf32>
    %54 = vector.shape_cast %38 : vector<2x128xf32> to vector<1x1x2x128xf32>
    tpu.vector_store %arg7[%c0_26, %c0_27, %c0_28, %c0_29], %54 {strides = array<i32>} : memref<1x1x2x128xf32, #tpu.memory_space<vmem>>, vector<1x1x2x128xf32>,
    return
  }
  func.func @transform_0(%arg0: i32, %arg1: i32, %arg2: memref<4xi32, #tpu.memory_space<smem>>) -> (i32, i32, i32, i32) {
    %c0_i32 = arith.constant 0 : i32
    %c0_i32_0 = arith.constant 0 : i32
    %c0_i32_1 = arith.constant 0 : i32
    return %arg0, %c0_i32, %arg1, %c0_i32_0 : i32, i32, i32, i32
  }
  func.func @transform_1(%arg0: i32, %arg1: i32, %arg2: memref<4xi32, #tpu.memory_space<smem>>) -> (i32, i32, i32, i32) {
    %c0_i32 = arith.constant 0 : i32
    %c0_i32_0 = arith.constant 0 : i32
    %c0_i32_1 = arith.constant 0 : i32
    return %arg0, %c0_i32, %arg1, %c0_i32_0 : i32, i32, i32, i32
  }
  func.func @transform_2(%arg0: i32, %arg1: i32, %arg2: memref<4xi32, #tpu.memory_space<smem>>) -> (i32, i32, i32, i32) {
    %c0_i32 = arith.constant 0 : i32
    %c0_i32_0 = arith.constant 0 : i32
    %c0_i32_1 = arith.constant 0 : i32
    return %arg0, %c0_i32, %arg1, %c0_i32_0 : i32, i32, i32, i32
  }
  func.func @transform_3(%arg0: i32, %arg1: i32, %arg2: memref<4xi32, #tpu.memory_space<smem>>) -> (i32, i32, i32, i32) {
    %c0_i32 = arith.constant 0 : i32
    %c0_i32_0 = arith.constant 0 : i32
    %c0_i32_1 = arith.constant 0 : i32
    return %arg0, %c0_i32, %arg1, %c0_i32_0 : i32, i32, i32, i32
  }
  func.func @transform_4(%arg0: i32, %arg1: i32, %arg2: memref<4xi32, #tpu.memory_space<smem>>) -> (i32, i32, i32, i32) {
    %c0_i32 = arith.constant 0 : i32
    %c0_i32_0 = arith.constant 0 : i32
    %c0_i32_1 = arith.constant 0 : i32
    return %arg0, %c0_i32, %arg1, %c0_i32_0 : i32, i32, i32, i32
  }
}

</mosaic_0001>

<llo_original>
// kernel: tpu_custom_call.1
$region0: #{tpu_custom_call.1}
  #allocation0 [shape = 'u32[]', space=smem, size = 0x4, offset = 0x4, fixed_abs, tag = 'smem constant byte address 0x4 - core index']
  #allocation1 [shape = 'u32[144,128]{1,0:T(1,128)}', space=vmem, size = 0x12000, scoped, tag = 'internal scratch']
  #allocation2 [shape = 's32[1]{0}', space=sflag, size = 0x4, scoped, tag = 'scoped memory for tpu_custom_call.1']
  #allocation3 [shape = 'u8[512]{0}', space=smem, size = 0x200, scoped, tag = 'prefetched SMEM operand 0']
  %s0 = inlined_call_operand.hbm [shape: s32[4], index: 0, kind: input, shape index: {}]
  %s1 = inlined_call_operand.hbm [shape: bf16[2,4,2,128], index: 1, kind: input, shape index: {}]
  %s2 = inlined_call_operand.hbm [shape: f32[2,3,2,128], index: 2, kind: input, shape index: {}]
  %s3 = inlined_call_operand.hbm [shape: f32[2,3,2,128], index: 3, kind: input, shape index: {}]
  %s4 = inlined_call_operand.hbm [shape: f32[2,3,2,128], index: 4, kind: output, shape index: {0}]
  %s5 = inlined_call_operand.hbm [shape: f32[2,1,2,128], index: 5, kind: output, shape index: {1}]
  %6 = xla_tuple %s4, %s5
  %s7 = sld [smem:[#allocation0]]
  $region65: #{tpu_custom_call.1} parent=0
    _
  %s9 = ssub.s32 1, %s7
  %s10 = scalar_select 0, %s9, %s7
  %12 = dma.hbm_to_smem %s0, 16, [#allocation3], [#allocation2]
  %13 = dma.done [#allocation2], 16
  %14 = sfence
  $region1: #{tpu_custom_call.1} parent=0
    #allocation4 [shape = 'u8[4096]{0}', space=vmem, size = 0x1000, scoped, tag = 'input window, operand 1']
    #allocation5 [shape = 's32[2]{0}', space=sflag, size = 0x8, scoped, tag = 'scoped memory for tpu_custom_call.1']
    #allocation6 [shape = 's32[2]{0}', space=sflag, size = 0x8, scoped, tag = 'scoped memory for tpu_custom_call.1']
    #allocation7 [shape = 'u8[6144]{0}', space=vmem, size = 0x1800, scoped, tag = 'input window, operand 2']
    #allocation8 [shape = 's32[2]{0}', space=sflag, size = 0x8, scoped, tag = 'scoped memory for tpu_custom_call.1']
    #allocation9 [shape = 'u8[6144]{0}', space=vmem, size = 0x1800, scoped, tag = 'input window, operand 3']
    #allocation10 [shape = 'u8[6144]{0}', space=vmem, size = 0x1800, scoped, tag = 'output window, operand 0']
    #allocation11 [shape = 'u8[2048]{0}', space=vmem, size = 0x800, scoped, tag = 'output window, operand 1']
    #allocation12 [shape = 's32[2]{0}', space=sflag, size = 0x8, scoped, tag = 'scoped memory for tpu_custom_call.1']
    %15 = vsyncpa [#allocation5], 0
    %s16 = scalar_lea.sflag [#allocation5], 1
    %17 = vsyncpa %s16, 0
    %18 = vsyncpa [#allocation8], 0
    %s19 = scalar_lea.sflag [#allocation8], 1
    %20 = vsyncpa %s19, 0
    %21 = vsyncpa [#allocation6], 0
    %s22 = scalar_lea.sflag [#allocation6], 1
    %23 = vsyncpa %s22, 0
    %24 = vsyncpa [#allocation12], 0
    %s25 = scalar_lea.sflag [#allocation12], 1
    %26 = vsyncpa %s25, 0
    loop: start=0, step=1, limit=4
    $region2: #{tpu_custom_call.1} parent=1 // loop_pre_header
      _
    $region3: #{tpu_custom_call.1} parent=1 // loop_header
      %s28 = sphi 0, %s32
      %p29 = scmp.ge.s32.totalorder %s28, 4
      %s35 = sphi 0, %s47
      %s36 = sphi 0, %s43
      %s37 = sphi 0, %s35
      %s38 = sphi 0, %s36
      %s39 = sphi 0, %s37
      %s40 = sphi 0, %s38
      %s52 = sphi 0, %s54
      %s55 = sphi 0, %s52
      %s56 = sphi 0, %s55
      %s72 = sphi 0, %s56
      %s80 = sphi 0, %s82
      %s83 = sphi 0, %s80
      %s84 = sphi 0, %s83
      %s100 = sphi 0, %s84
      %s108 = sphi 0, %s110
      %s111 = sphi 0, %s108
      %s112 = sphi 0, %s111
      %s128 = sphi 0, %s112
      %s136 = sphi 0, %s138
      %s139 = sphi 0, %s136
      %s140 = sphi 0, %s139
      %s156 = sphi 0, %s140
      %s164 = sphi 0, %s166
      %s167 = sphi 0, %s164
      %s168 = sphi 0, %s167
      %s184 = sphi 0, %s168
    $region4: #{tpu_custom_call.1} parent=1 // loop_header_branch
      %31 = sbr.rel (%p29) target = $region8
    $region5: #{tpu_custom_call.1} parent=1 // loop_body
      %s33 = ssub.s32 %s28, 1
      %s34 = ssub.s32 %s28, 2
      %s41 = sadd.s32 1, %s36
      %p42 = scmp.ge.s32.totalorder %s41, 1
      %s43 = scalar_select %p42, 0, %s41
      %s44 = sadd.s32 1, %s35
      %s45 = scalar_select %p42, %s44, %s35
      %p46 = scmp.ge.s32.totalorder %s45, 2
      %s47 = scalar_select %p46, 0, %s45
      %s48 = ssub.s32 %s35, %s47
      %s49 = ssub.s32 %s36, %s43
      %s50 = sor.u32 %s48, %s49
      %p51 = scmp.eq.s32.totalorder %s50, 0
      %s53 = sadd.s32 %s52, 1
      %s54 = scalar_select %p51, %s52, %s53
      %p57 = pneg %p51
      %p58 = scmp.eq.s32.totalorder %s28, 1
      %p59 = por %p57, %p58
      %p60 = scmp.ne.s32.totalorder %s52, %s55
      %p61 = scmp.eq.s32.totalorder %s28, 0
      %p62 = por %p60, %p61
      %p63 = scmp.ne.s32.totalorder %s52, %s55
      %p64 = scmp.eq.s32.totalorder %s33, 1
      %p65 = por %p63, %p64
      %p66 = scmp.ne.s32.totalorder %s55, %s56
      %p67 = scmp.eq.s32.totalorder %s33, 0
      %p68 = por %p66, %p67
      %p69 = scmp.ne.s32.totalorder %s55, %s56
      %p70 = scmp.eq.s32.totalorder %s34, 1
      %p71 = por %p69, %p70
      %p73 = scmp.ne.s32.totalorder %s56, %s72
      %p74 = scmp.eq.s32.totalorder %s34, 0
      %p75 = por %p73, %p74
      %s76 = ssub.s32 %s35, %s47
      %s77 = ssub.s32 %s36, %s43
      %s78 = sor.u32 %s76, %s77
      %p79 = scmp.eq.s32.totalorder %s78, 0
      %s81 = sadd.s32 %s80, 1
      %s82 = scalar_select %p79, %s80, %s81
      %p85 = pneg %p79
      %p86 = scmp.eq.s32.totalorder %s28, 1
      %p87 = por %p85, %p86
      %p88 = scmp.ne.s32.totalorder %s80, %s83
      %p89 = scmp.eq.s32.totalorder %s28, 0
      %p90 = por %p88, %p89
      %p91 = scmp.ne.s32.totalorder %s80, %s83
      %p92 = scmp.eq.s32.totalorder %s33, 1
      %p93 = por %p91, %p92
      %p94 = scmp.ne.s32.totalorder %s83, %s84
      %p95 = scmp.eq.s32.totalorder %s33, 0
      %p96 = por %p94, %p95
      %p97 = scmp.ne.s32.totalorder %s83, %s84
      %p98 = scmp.eq.s32.totalorder %s34, 1
      %p99 = por %p97, %p98
      %p101 = scmp.ne.s32.totalorder %s84, %s100
      %p102 = scmp.eq.s32.totalorder %s34, 0
      %p103 = por %p101, %p102
      %s104 = ssub.s32 %s35, %s47
      %s105 = ssub.s32 %s36, %s43
      %s106 = sor.u32 %s104, %s105
      %p107 = scmp.eq.s32.totalorder %s106, 0
      %s109 = sadd.s32 %s108, 1
      %s110 = scalar_select %p107, %s108, %s109
      %p113 = pneg %p107
      %p114 = scmp.eq.s32.totalorder %s28, 1
      %p115 = por %p113, %p114
      %p116 = scmp.ne.s32.totalorder %s108, %s111
      %p117 = scmp.eq.s32.totalorder %s28, 0
      %p118 = por %p116, %p117
      %p119 = scmp.ne.s32.totalorder %s108, %s111
      %p120 = scmp.eq.s32.totalorder %s33, 1
      %p121 = por %p119, %p120
      %p122 = scmp.ne.s32.totalorder %s111, %s112
      %p123 = scmp.eq.s32.totalorder %s33, 0
      %p124 = por %p122, %p123
      %p125 = scmp.ne.s32.totalorder %s111, %s112
      %p126 = scmp.eq.s32.totalorder %s34, 1
      %p127 = por %p125, %p126
      %p129 = scmp.ne.s32.totalorder %s112, %s128
      %p130 = scmp.eq.s32.totalorder %s34, 0
      %p131 = por %p129, %p130
      %s132 = ssub.s32 %s35, %s47
      %s133 = ssub.s32 %s36, %s43
      %s134 = sor.u32 %s132, %s133
      %p135 = scmp.eq.s32.totalorder %s134, 0
      %s137 = sadd.s32 %s136, 1
      %s138 = scalar_select %p135, %s136, %s137
      %p141 = pneg %p135
      %p142 = scmp.eq.s32.totalorder %s28, 1
      %p143 = por %p141, %p142
      %p144 = scmp.ne.s32.totalorder %s136, %s139
      %p145 = scmp.eq.s32.totalorder %s28, 0
      %p146 = por %p144, %p145
      %p147 = scmp.ne.s32.totalorder %s136, %s139
      %p148 = scmp.eq.s32.totalorder %s33, 1
      %p149 = por %p147, %p148
      %p150 = scmp.ne.s32.totalorder %s139, %s140
      %p151 = scmp.eq.s32.totalorder %s33, 0
      %p152 = por %p150, %p151
      %p153 = scmp.ne.s32.totalorder %s139, %s140
      %p154 = scmp.eq.s32.totalorder %s34, 1
      %p155 = por %p153, %p154
      %p157 = scmp.ne.s32.totalorder %s140, %s156
      %p158 = scmp.eq.s32.totalorder %s34, 0
      %p159 = por %p157, %p158
      %s160 = ssub.s32 %s35, %s47
      %s161 = ssub.s32 %s36, %s43
      %s162 = sor.u32 %s160, %s161
      %p163 = scmp.eq.s32.totalorder %s162, 0
      %s165 = sadd.s32 %s164, 1
      %s166 = scalar_select %p163, %s164, %s165
      %p169 = pneg %p163
      %p170 = scmp.eq.s32.totalorder %s28, 1
      %p171 = por %p169, %p170
      %p172 = scmp.ne.s32.totalorder %s164, %s167
      %p173 = scmp.eq.s32.totalorder %s28, 0
      %p174 = por %p172, %p173
      %p175 = scmp.ne.s32.totalorder %s164, %s167
      %p176 = scmp.eq.s32.totalorder %s33, 1
      %p177 = por %p175, %p176
      %p178 = scmp.ne.s32.totalorder %s167, %s168
      %p179 = scmp.eq.s32.totalorder %s33, 0
      %p180 = por %p178, %p179
      %p181 = scmp.ne.s32.totalorder %s167, %s168
      %p182 = scmp.eq.s32.totalorder %s34, 1
      %p183 = por %p181, %p182
      %p185 = scmp.ne.s32.totalorder %s168, %s184
      %p186 = scmp.eq.s32.totalorder %s34, 0
      %p187 = por %p185, %p186
      %p188 = scmp.le.s32.totalorder 1, %s28
      %p189 = scmp.lt.s32.totalorder %s28, 3
      %p190 = pnand %p188, %p189
      %p191 = pneg %p190
      // Predicated region
      $region9: #{tpu_custom_call.1} parent=5 // pred_check
        _
      $region10: #{tpu_custom_call.1} parent=5 // pred_check_branch
        %193 = sbr.rel (%p190) target = $region12
      $region11: #{tpu_custom_call.1} parent=5 // pred_region
        %s194 = ssub.s32 %s28, 1
      $region12: #{tpu_custom_call.1} parent=5 // pred_fallthru
        _
      %p195 = scmp.lt.s32.totalorder %s28, 2
      // Predicated region
      $region13: #{tpu_custom_call.1} parent=5 // pred_check
        %p196 = pneg %p195
      $region14: #{tpu_custom_call.1} parent=5 // pred_check_branch
        %198 = sbr.rel (%p196) target = $region16
      $region15: #{tpu_custom_call.1} parent=5 // pred_region
        // Predicated region
        $region17: #{tpu_custom_call.1} parent=15 // pred_check
          %p199 = pneg %p62
        $region18: #{tpu_custom_call.1} parent=15 // pred_check_branch
          %201 = sbr.rel (%p199) target = $region20
        $region19: #{tpu_custom_call.1} parent=15 // pred_region
          %s202 = sand.u32 %s52, 1
          %s203 = scalar_lea.sflag [#allocation5], %s202
          %s204 = sand.u32 %s52, 1
          %s205 = smul.addr %s204, 4
          %s206 = scalar_lea.vmem [#allocation4], %s205
          %s208 = ssub.s32 64, 64
          %209 = vsyncadd %s203, %s208
          %s210 = smul.addr %s35, 4
          %s211 = sadd.s32 %s36, %s210
          %s212 = smul.addr %s211, 16
          %s213 = scalar_lea.hbm %s1, %s212
          %s214 = sshll.u32 %s206, 4
          %s215 = int_to_ptr.vmem [resolvable:$true] %s214
          %220 = dma.hbm_to_vmem [thread:$0]  %s213, 64, %s215, %s203, 16, 16, 1
        $region20: #{tpu_custom_call.1} parent=15 // pred_fallthru
          _
        // Predicated region
        $region21: #{tpu_custom_call.1} parent=15 // pred_check
          %p221 = pneg %p90
        $region22: #{tpu_custom_call.1} parent=15 // pred_check_branch
          %223 = sbr.rel (%p221) target = $region24
        $region23: #{tpu_custom_call.1} parent=15 // pred_region
          %s224 = sand.u32 %s28, 1
          %s225 = scalar_lea.sflag [#allocation8], %s224
          %s226 = sand.u32 %s80, 1
          %s227 = smul.addr %s226, 6
          %s228 = scalar_lea.vmem [#allocation7], %s227
          %s230 = ssub.s32 96, 96
          %231 = vsyncadd %s225, %s230
          %s232 = smul.addr %s35, 3
          %s233 = sadd.s32 %s36, %s232
          %s234 = smul.addr %s233, 32
          %s235 = scalar_lea.hbm %s2, %s234
          %s236 = sshll.u32 %s228, 4
          %s237 = int_to_ptr.vmem [resolvable:$true] %s236
          %242 = dma.hbm_to_vmem [thread:$0]  %s235, 96, %s237, %s225, 32, 32, 2
        $region24: #{tpu_custom_call.1} parent=15 // pred_fallthru
          _
        // Predicated region
        $region25: #{tpu_custom_call.1} parent=15 // pred_check
          %p243 = pneg %p118
        $region26: #{tpu_custom_call.1} parent=15 // pred_check_branch
          %245 = sbr.rel (%p243) target = $region28
        $region27: #{tpu_custom_call.1} parent=15 // pred_region
          %s246 = sand.u32 %s28, 1
          %s247 = scalar_lea.sflag [#allocation8], %s246
          %s248 = sand.u32 %s108, 1
          %s249 = smul.addr %s248, 6
          %s250 = scalar_lea.vmem [#allocation9], %s249
          %s252 = ssub.s32 96, 96
          %253 = vsyncadd %s247, %s252
          %s254 = smul.addr %s35, 3
          %s255 = sadd.s32 %s36, %s254
          %s256 = smul.addr %s255, 32
          %s257 = scalar_lea.hbm %s3, %s256
          %s258 = sshll.u32 %s250, 4
          %s259 = int_to_ptr.vmem [resolvable:$true] %s258
          %264 = dma.hbm_to_vmem [thread:$0]  %s257, 96, %s259, %s247, 32, 32, 2
        $region28: #{tpu_custom_call.1} parent=15 // pred_fallthru
          _
      $region16: #{tpu_custom_call.1} parent=5 // pred_fallthru
        _
      %p265 = scmp.le.s32.totalorder 1, %s28
      %p266 = scmp.lt.s32.totalorder %s28, 3
      %p267 = pnand %p265, %p266
      %p268 = pneg %p267
      // Predicated region
      $region29: #{tpu_custom_call.1} parent=5 // pred_check
        _
      $region30: #{tpu_custom_call.1} parent=5 // pred_check_branch
        %270 = sbr.rel (%p267) target = $region32
      $region31: #{tpu_custom_call.1} parent=5 // pred_region
        %s271 = ssub.s32 %s28, 1
        %s272 = sand.u32 %s55, 1
        %s273 = scalar_lea.sflag [#allocation5], %s272
        %s274 = sand.u32 %s55, 1
        %s275 = smul.addr %s274, 4
        %s276 = scalar_lea.vmem [#allocation4], %s275
        // Predicated region
        $region33: #{tpu_custom_call.1} parent=31 // pred_check
          %p277 = pneg %p68
        $region34: #{tpu_custom_call.1} parent=31 // pred_check_branch
          %279 = sbr.rel (%p277) target = $region36
        $region35: #{tpu_custom_call.1} parent=31 // pred_region
          %280 = dma.done %s273, 64
        $region36: #{tpu_custom_call.1} parent=31 // pred_fallthru
          _
        %s281 = sand.u32 %s33, 1
        %s282 = scalar_lea.sflag [#allocation8], %s281
        %s283 = sand.u32 %s83, 1
        %s284 = smul.addr %s283, 6
        %s285 = scalar_lea.vmem [#allocation7], %s284
        // Predicated region
        $region37: #{tpu_custom_call.1} parent=31 // pred_check
          %p286 = pneg %p96
        $region38: #{tpu_custom_call.1} parent=31 // pred_check_branch
          %288 = sbr.rel (%p286) target = $region40
        $region39: #{tpu_custom_call.1} parent=31 // pred_region
          %289 = dma.done %s282, 96
        $region40: #{tpu_custom_call.1} parent=31 // pred_fallthru
          _
        %s290 = sand.u32 %s33, 1
        %s291 = scalar_lea.sflag [#allocation8], %s290
        %s292 = sand.u32 %s111, 1
        %s293 = smul.addr %s292, 6
        %s294 = scalar_lea.vmem [#allocation9], %s293
        // Predicated region
        $region41: #{tpu_custom_call.1} parent=31 // pred_check
          %p295 = pneg %p124
        $region42: #{tpu_custom_call.1} parent=31 // pred_check_branch
          %297 = sbr.rel (%p295) target = $region44
        $region43: #{tpu_custom_call.1} parent=31 // pred_region
          %298 = dma.done %s291, 96
        $region44: #{tpu_custom_call.1} parent=31 // pred_fallthru
          _
        %s299 = sand.u32 %s55, 1
        %s300 = scalar_lea.sflag [#allocation5], %s299
        %s301 = sand.u32 %s55, 1
        %s302 = smul.addr %s301, 4
        %s303 = scalar_lea.vmem [#allocation4], %s302
        %p304 = pneg %p68
        %p305 = pneg %p65
        %s306 = sand.u32 %s33, 1
        %s307 = scalar_lea.sflag [#allocation8], %s306
        %s308 = sand.u32 %s83, 1
        %s309 = smul.addr %s308, 6
        %s310 = scalar_lea.vmem [#allocation7], %s309
        %p311 = pneg %p96
        %p312 = pneg %p93
        %s313 = sand.u32 %s33, 1
        %s314 = scalar_lea.sflag [#allocation8], %s313
        %s315 = sand.u32 %s111, 1
        %s316 = smul.addr %s315, 6
        %s317 = scalar_lea.vmem [#allocation9], %s316
        %p318 = pneg %p124
        %p319 = pneg %p121
        %p320 = pneg %p152
        %p321 = pneg %p149
        %s322 = sand.u32 %s139, 1
        %s323 = scalar_lea.sflag [#allocation6], %s322
        %s324 = sand.u32 %s139, 1
        %s325 = smul.addr %s324, 6
        %s326 = scalar_lea.vmem [#allocation10], %s325
        %p327 = pneg %p180
        %p328 = pneg %p177
        %s329 = sand.u32 %s167, 1
        %s330 = scalar_lea.sflag [#allocation12], %s329
        %s331 = sand.u32 %s167, 1
        %s332 = smul.addr %s331, 2
        %s333 = scalar_lea.vmem [#allocation11], %s332
        %v334 = vld [vmem:[%s276] sm:$0x1]
        %v335 = vunpack.c.l.bf16 %v334
        %s336 = sld [smem:[#allocation3]]
        %s337 = scvt.s32.f32 %s336
        %v338 = vstv %s337
        %s339 = scalar_lea.vmem %s276, 1 [#allocation4]
        %v340 = vld [vmem:[%s339] sm:$0x1]
        %v341 = vunpack.c.l.bf16 %v340
        %s342 = sld [smem:[#allocation3 + $0x1]]
        %s343 = scvt.s32.f32 %s342
        %vm344 = vcmp.gt.f32.partialorder %v341, %v335
        %v345 = vsel %vm344, %v341, %v335
        %v346 = vstv %s343
        %v347 = vsel %vm344, %v346, %v338
        %s348 = scalar_lea.vmem %s276, 2 [#allocation4]
        %v349 = vld [vmem:[%s348] sm:$0x1]
        %v350 = vunpack.c.l.bf16 %v349
        %s351 = sld [smem:[#allocation3 + $0x2]]
        %s352 = scvt.s32.f32 %s351
        %vm353 = vcmp.gt.f32.partialorder %v350, %v345
        %v354 = vsel %vm353, %v350, %v345
        %v355 = vstv %s352
        %v356 = vsel %vm353, %v355, %v347
        %s357 = scalar_lea.vmem %s276, 3 [#allocation4]
        %v358 = vld [vmem:[%s357] sm:$0x1]
        %v359 = vunpack.c.l.bf16 %v358
        %s360 = sld [smem:[#allocation3 + $0x3]]
        %s361 = scvt.s32.f32 %s360
        %vm362 = vcmp.gt.f32.partialorder %v359, %v354
        %v363 = vstv %s361
        %v364 = vsel %vm362, %v363, %v356
        %vm365 = vcmp.gt.f32.partialorder %v364, 0.5
        %v366 = vld [vmem:[%s294] sm:$0x3]
        %v367 = vld [vmem:[%s294 + $0x2] sm:$0x3]
        %v368 = vld [vmem:[%s294 + $0x4] sm:$0x3]
        %v369 = vld [vmem:[%s285] sm:$0x3]
        %v370 = vld [vmem:[%s285 + $0x2] sm:$0x3]
        %v371 = vld [vmem:[%s285 + $0x4] sm:$0x3]
        %v372 = vsel %vm365, 1, 0
        %vm373 = vcmp.eq.s32.totalorder %v372, 1
        %v374 = vsel %vm373, %v366, %v369
        %v375 = vsel %vm373, %v367, %v370
        %v376 = vsel %vm373, %v368, %v371
        %377 = vst [vmem:[%s326] sm:$0x3] %v374
        %378 = vst [vmem:[%s326 + $0x2] sm:$0x3] %v375
        %379 = vst [vmem:[%s326 + $0x4] sm:$0x3] %v376
        %380 = vst [vmem:[%s333] sm:$0x3] %v364
        %s381 = sand.u32 %s139, 1
        %s382 = scalar_lea.sflag [#allocation6], %s381
        %s383 = sand.u32 %s139, 1
        %s384 = smul.addr %s383, 6
        %s385 = scalar_lea.vmem [#allocation10], %s384
        %s386 = sand.u32 %s167, 1
        %s387 = scalar_lea.sflag [#allocation12], %s386
        %s388 = sand.u32 %s167, 1
        %s389 = smul.addr %s388, 2
        %s390 = scalar_lea.vmem [#allocation11], %s389
        // Predicated region
        $region45: #{tpu_custom_call.1} parent=31 // pred_check
          %p391 = pneg %p149
        $region46: #{tpu_custom_call.1} parent=31 // pred_check_branch
          %393 = sbr.rel (%p391) target = $region48
        $region47: #{tpu_custom_call.1} parent=31 // pred_region
          %s395 = ssub.s32 96, 96
          %396 = vsyncadd %s382, %s395
          %s397 = smul.addr %s37, 3
          %s398 = sadd.s32 %s38, %s397
          %s399 = smul.addr %s398, 32
          %s400 = scalar_lea.hbm %s4, %s399
          %s401 = sshll.u32 %s385, 4
          %s402 = int_to_ptr.vmem [resolvable:$true] %s401
          %407 = dma.vmem_to_hbm [thread:$0]  %s402, 96, %s400, %s382, 32, 32, 2
        $region48: #{tpu_custom_call.1} parent=31 // pred_fallthru
          _
        // Predicated region
        $region49: #{tpu_custom_call.1} parent=31 // pred_check
          %p408 = pneg %p177
        $region50: #{tpu_custom_call.1} parent=31 // pred_check_branch
          %410 = sbr.rel (%p408) target = $region52
        $region51: #{tpu_custom_call.1} parent=31 // pred_region
          %s412 = ssub.s32 32, 32
          %413 = vsyncadd %s387, %s412
          %s414 = sadd.s32 %s38, %s37
          %s415 = smul.addr %s414, 32
          %s416 = scalar_lea.hbm %s5, %s415
          %s418 = sshll.u32 %s390, 4
          %s419 = int_to_ptr.vmem [resolvable:$true] %s418
          %421 = dma.vmem_to_hbm [thread:$0]  %s419, 32, %s416, %s387
        $region52: #{tpu_custom_call.1} parent=31 // pred_fallthru
          _
      $region32: #{tpu_custom_call.1} parent=5 // pred_fallthru
        _
      %p422 = scmp.le.s32.totalorder 2, %s28
      // Predicated region
      $region53: #{tpu_custom_call.1} parent=5 // pred_check
        %p423 = pneg %p422
      $region54: #{tpu_custom_call.1} parent=5 // pred_check_branch
        %425 = sbr.rel (%p423) target = $region56
      $region55: #{tpu_custom_call.1} parent=5 // pred_region
        %s426 = ssub.s32 %s28, 2
        // Predicated region
        $region57: #{tpu_custom_call.1} parent=55 // pred_check
          %p427 = pneg %p155
        $region58: #{tpu_custom_call.1} parent=55 // pred_check_branch
          %429 = sbr.rel (%p427) target = $region60
        $region59: #{tpu_custom_call.1} parent=55 // pred_region
          %s430 = sand.u32 %s140, 1
          %s431 = scalar_lea.sflag [#allocation6], %s430
          %s432 = sand.u32 %s140, 1
          %s433 = smul.addr %s432, 6
          %s434 = scalar_lea.vmem [#allocation10], %s433
          %435 = dma.done %s431, 96
        $region60: #{tpu_custom_call.1} parent=55 // pred_fallthru
          _
        // Predicated region
        $region61: #{tpu_custom_call.1} parent=55 // pred_check
          %p436 = pneg %p183
        $region62: #{tpu_custom_call.1} parent=55 // pred_check_branch
          %438 = sbr.rel (%p436) target = $region64
        $region63: #{tpu_custom_call.1} parent=55 // pred_region
          %s439 = sand.u32 %s168, 1
          %s440 = scalar_lea.sflag [#allocation12], %s439
          %s441 = sand.u32 %s168, 1
          %s442 = smul.addr %s441, 2
          %s443 = scalar_lea.vmem [#allocation11], %s442
          %444 = dma.done %s440, 32
        $region64: #{tpu_custom_call.1} parent=55 // pred_fallthru
          _
      $region56: #{tpu_custom_call.1} parent=5 // pred_fallthru
        _
    $region6: #{tpu_custom_call.1} parent=1 // loop_footer
      %s32 = sadd.s32 1, %s28
    $region7: #{tpu_custom_call.1} parent=1 // loop_footer_branch
      %27 = sbr.rel target = $region3
    $region8: #{tpu_custom_call.1} parent=1 // loop_exit
      _
    %445 = vsyncpa [#allocation5], 1
    %s446 = scalar_lea.sflag [#allocation5], 1
    %447 = vsyncpa %s446, 1
    %448 = vsyncpa [#allocation8], 1
    %s449 = scalar_lea.sflag [#allocation8], 1
    %450 = vsyncpa %s449, 1
    %451 = vsyncpa [#allocation6], 1
    %s452 = scalar_lea.sflag [#allocation6], 1
    %453 = vsyncpa %s452, 1
    %454 = vsyncpa [#allocation12], 1
    %s455 = scalar_lea.sflag [#allocation12], 1
    %456 = vsyncpa %s455, 1

</llo_original>
